<compile_context>
chip_gen: v7x
topology: tpu7x:2x2x1
jax: 0.10.0
libtpu: 0.0.40
codegen_flags: <defaults>
</compile_context>

<pallas_src>
import functools
import math

import jax
import jax.numpy as jnp
from jax.experimental import pallas as pl
from jax.experimental.pallas import tpu as pltpu


def _fcgram2d_kernel(x_ref, wcol_ref, wrt_ref, o_ref, *, d, C, M, N):
    """FC-Gram one-sided 2D continuation for a block of TB (M, N) slices."""
    TB = x_ref.shape[0]
    No = N + 2 * C

    x = x_ref[...]                                # (TB, M, N)
    wcol = wcol_ref[...]                          # (2d, 2C) = [[ArQr.T, 0], [0, AlQl.T]]
    wrt = wrt_ref[...].astype(jnp.float32)        # (2C, d)  = [ArQr ; AlQl] stacked

    # ---- stage 1: extend_left_right, fused across slices and right/left sides.
    # Boundary columns [right | left] flattened over (TB, M): one MXU matmul.
    col_bnd = jnp.concatenate([x[:, :, N - d:], x[:, :, :d]], axis=-1)        # (TB, M, 2d)
    col_bnd = col_bnd.reshape(TB * M, 2 * d)
    cols_cont = jnp.dot(col_bnd, wcol, preferred_element_type=jnp.float32)    # (TB*M, 2C)
    cols_cont = cols_cont.astype(x.dtype).reshape(TB, M, 2 * C)

    # Full No-lane rows built in registers; ONE coalesced store for rows [:M].
    row_full = jnp.concatenate([x, cols_cont], axis=-1)                       # (TB, M, No)
    o_ref[:, :M, :] = row_full

    # ---- stage 2: extend_top_bottom.  Boundary rows come from the in-register
    # row_full (no o_ref readback).  Contraction length is only d, so use a short
    # unrolled VPU multiply-add chain instead of TB tiny batched MXU matmuls.
    rbot = row_full[:, M - d:M, :].astype(jnp.float32)    # (TB, d, No) bottom boundary
    rtop = row_full[:, :d, :].astype(jnp.float32)         # (TB, d, No) top boundary

    bot = None    # (TB, C, No) f32 accumulators
    top = None
    for k in range(d):
        ar_k = wrt[:C, k:k + 1][None, :, :]    # (1, C, 1)  = ArQr[:, k]
        al_k = wrt[C:, k:k + 1][None, :, :]    # (1, C, 1)  = AlQl[:, k]
        rb_k = rbot[:, k:k + 1, :]             # (TB, 1, No)
        rt_k = rtop[:, k:k + 1, :]             # (TB, 1, No)
        bterm = ar_k * rb_k                    # (TB, C, No)
        tterm = al_k * rt_k
        bot = bterm if bot is None else bot + bterm
        top = tterm if top is None else top + tterm

    o_ref[:, M:M + C, :] = bot.astype(o_ref.dtype)
    o_ref[:, M + C:, :] = top.astype(o_ref.dtype)


def _round_up(v, m):
    return -(-v // m) * m


def _choose_tb(BC, M, N, Mo, No, C, d, itemsize,
               vmem_budget_bytes=24 * 1024 * 1024, tb_max=128):
    """Slices per grid step, sized against (8,128)-padded VMEM footprints:
    double-buffered in/out pipeline copies plus in-kernel f32 temporaries."""
    f32 = 4
    in_tile = _round_up(M, 8) * _round_up(N, 128) * itemsize
    out_tile = _round_up(Mo, 8) * _round_up(No, 128) * itemsize
    pipe = 2 * (in_tile + out_tile)                                # double-buffered DMA
    tmp = (_round_up(M, 8) * _round_up(2 * d, 128) * f32           # boundary columns
           + _round_up(M, 8) * _round_up(2 * C, 128) * f32         # cols_cont (f32)
           + _round_up(M, 8) * _round_up(No, 128) * f32            # row_full
           + 4 * _round_up(C, 8) * _round_up(No, 128) * f32)       # bot/top acc + bcasts
    per_slice = pipe + tmp

    cap = int(max(1, min(tb_max, vmem_budget_bytes // per_slice)))
    if BC <= cap:
        return int(BC), per_slice
    # Prefer an exact divisor of BC (no ragged final block, no pad/slice round-trip).
    div = max(t for t in range(1, cap + 1) if BC % t == 0)
    if 2 * div >= cap:
        return int(div), per_slice
    # Poor divisors: use a ragged final block (Pallas drops OOB output writes).
    return cap, per_slice


def fcgram_forward_2d(x, AlQl, ArQr, *, tb=None):
    """FCGram.forward(x, dim=2, one_sided=True) equivalent.

    x: (..., M, N), AlQl/ArQr: (C, d). Returns (..., M+2C, N+2C).
    """
    # TODO(synk): one_sided=False ordering and the dim=1/3 variants are not implemented;
    # this reproduces the default forward(dim=2, one_sided=True) path.
    *batch, M, N = x.shape
    C, d = AlQl.shape
    BC = math.prod(batch) if batch else 1
    Mo, No = M + 2 * C, N + 2 * C

    dtype = x.dtype
    itemsize = jnp.dtype(dtype).itemsize
    AlQl = AlQl.astype(dtype)    # matches torch's .to(dtype=x.dtype)
    ArQr = ArQr.astype(dtype)

    # Stage-1 weight: block-diagonal so both sides fuse into ONE MXU matmul:
    #   [right_bnd | left_bnd] @ Wcol -> [right_cont | left_cont]
    Wcol = jnp.zeros((2 * d, 2 * C), dtype=dtype)
    Wcol = Wcol.at[:d, :C].set(ArQr.T)
    Wcol = Wcol.at[d:, C:].set(AlQl.T)
    # Stage-2 weights stacked [ArQr ; AlQl]; the kernel lane-broadcasts their columns
    # for the short VPU multiply-add chain.
    Wrt = jnp.concatenate([ArQr, AlQl], axis=0)    # (2C, d)

    x2 = x.reshape(BC, M, N)
    tb_auto, per_slice = _choose_tb(BC, M, N, Mo, No, C, d, itemsize)
    tb = tb_auto if tb is None else int(tb)
    grid = (pl.cdiv(BC, tb),)

    vmem_limit = int(min(48 * 1024 * 1024, max(16 * 1024 * 1024, 2 * tb * per_slice)))

    kernel = functools.partial(_fcgram2d_kernel, d=d, C=C, M=M, N=N)

    cost = pl.CostEstimate(
        flops=int(BC * (2 * M * (2 * d) * (2 * C) + 2 * (2 * C) * d * No)),
        transcendentals=0,
        bytes_accessed=int(BC * (M * N + Mo * No) * itemsize
                           + (Wcol.size + Wrt.size) * itemsize),
    )

    out = pl.pallas_call(
        kernel,
        out_shape=jax.ShapeDtypeStruct((BC, Mo, No), dtype),
        grid=grid,
        in_specs=[
            pl.BlockSpec((tb, M, N), lambda b: (b, 0, 0)),
            pl.BlockSpec((2 * d, 2 * C), lambda b: (0, 0)),
            pl.BlockSpec((2 * C, d), lambda b: (0, 0)),
        ],
        out_specs=pl.BlockSpec((tb, Mo, No), lambda b: (b, 0, 0)),
        compiler_params=pltpu.CompilerParams(
            dimension_semantics=("parallel",),
            vmem_limit_bytes=vmem_limit,
        ),
        cost_estimate=cost,
    )(x2, Wcol, Wrt)

    return out.reshape(*batch, Mo, No)


def _reference_forward_2d(x, AlQl, ArQr, d):
    """Plain-JAX reference mirroring the PyTorch module (for verification)."""
    # extend_left_right (one_sided=True)
    left_bnd = x[..., :d]
    right_bnd = x[..., -d:]
    left_cont = jnp.matmul(left_bnd, AlQl.T)
    right_cont = jnp.matmul(right_bnd, ArQr.T)
    x = jnp.concatenate([x, right_cont, left_cont], axis=-1)
    # extend_top_bottom (one_sided=True)
    top_bnd = x[..., :d, :]
    bottom_bnd = x[..., -d:, :]
    bottom_cont = jnp.einsum('cd,...dn->...cn', ArQr, bottom_bnd)
    top_cont = jnp.einsum('cd,...dn->...cn', AlQl, top_bnd)
    return jnp.concatenate([x, bottom_cont, top_cont], axis=-2)


if __name__ == "__main__":
    # Module defaults: d=4, n_additional_pts=50 -> C = 25.
    d = 4
    n_additional_pts = 50
    C = n_additional_pts // 2

    key = jax.random.PRNGKey(0)
    kx, kl, kr = jax.random.split(key, 3)

    # Synthetic deterministic stand-ins for the precomputed Gram matrices (shape (C, d)).
    AlQl = jax.random.normal(kl, (C, d), dtype=jnp.float32) * 0.1
    ArQr = jax.random.normal(kr, (C, d), dtype=jnp.float32) * 0.1

    # Input: (batch=2, channels=4, M=16, N=16), NCHW.
    x = jax.random.normal(kx, (2, 4, 16, 16), dtype=jnp.float32)

    out = fcgram_forward_2d(x, AlQl, ArQr)
    out = jax.block_until_ready(out)

    ref = _reference_forward_2d(x, AlQl, ArQr, d)
    assert out.shape == (2, 4, 16 + 2 * C, 16 + 2 * C), out.shape
    assert jnp.allclose(out, ref, atol=1e-5, rtol=1e-5), "mismatch vs reference"

    print("KERNEL_OK")
</pallas_src>

<mosaic_0001>
module attributes {stable_mosaic.version = 11 : i64} {
  func.func @_fcgram2d_kernel(%arg0: i32, %arg1: memref<8x16x16xf32, #tpu.memory_space<vmem>>, %arg2: memref<8x50xf32, #tpu.memory_space<vmem>>, %arg3: memref<50x4xf32, #tpu.memory_space<vmem>>, %arg4: memref<8x66x66xf32, #tpu.memory_space<vmem>>) attributes {dimension_semantics = [#tpu.dimension_semantics<parallel>], iteration_bounds = array<i64: 1>, scalar_prefetch = 0 : i64, scratch_operands = 0 : i64, tpu.core_type = #tpu.core_type<tc>, window_params = [{transform_indices = @transform_0, window_bounds = array<i64: 8, 16, 16>}, {pipeline_mode = #tpu.pipeline_mode<synchronous>, transform_indices = @transform_1, window_bounds = array<i64: 8, 50>}, {pipeline_mode = #tpu.pipeline_mode<synchronous>, transform_indices = @transform_2, window_bounds = array<i64: 50, 4>}, {transform_indices = @transform_3, window_bounds = array<i64: 8, 66, 66>}]} {
    %c0 = arith.constant 0 : index
    %c0_0 = arith.constant 0 : index
    %c0_1 = arith.constant 0 : index
    %0 = vector.load %arg1[%c0, %c0_0, %c0_1] : memref<8x16x16xf32, #tpu.memory_space<vmem>>, vector<8x16x16xf32>
    %c0_2 = arith.constant 0 : index
    %c0_3 = arith.constant 0 : index
    %1 = vector.load %arg2[%c0_2, %c0_3] : memref<8x50xf32, #tpu.memory_space<vmem>>, vector<8x50xf32>
    %c0_4 = arith.constant 0 : index
    %c0_5 = arith.constant 0 : index
    %2 = vector.load %arg3[%c0_4, %c0_5] : memref<50x4xf32, #tpu.memory_space<vmem>>, vector<50x4xf32>
    %3 = vector.extract_strided_slice %0 {offsets = [0, 0, 12], sizes = [8, 16, 4], strides = [1, 1, 1]} : vector<8x16x16xf32> to vector<8x16x4xf32>
    %4 = vector.extract_strided_slice %0 {offsets = [0, 0, 0], sizes = [8, 16, 4], strides = [1, 1, 1]} : vector<8x16x16xf32> to vector<8x16x4xf32>
    %5 = tpu.concatenate %3, %4 in 2 : vector<8x16x4xf32>, vector<8x16x4xf32> -> vector<8x16x8xf32>
    %6 = vector.shape_cast %5 : vector<8x16x8xf32> to vector<128x8xf32>
    %cst = arith.constant dense<0.000000e+00> : vector<128x50xf32>
    %7 = tpu.matmul %6, %1, %cst {dimension_numbers = #tpu.dot_dimension_numbers<[1], [0], [0], [1], [0, 0, 1, 1], [], []>} : vector<128x8xf32>, vector<8x50xf32>, vector<128x50xf32> -> vector<128x50xf32>
    %8 = vector.shape_cast %7 : vector<128x50xf32> to vector<8x16x50xf32>
    %9 = tpu.concatenate %0, %8 in 2 : vector<8x16x16xf32>, vector<8x16x50xf32> -> vector<8x16x66xf32>
    %c0_6 = arith.constant 0 : index
    %c0_7 = arith.constant 0 : index
    %c0_8 = arith.constant 0 : index
    %10 = vector.load %arg4[%c0_6, %c0_7, %c0_8] : memref<8x66x66xf32, #tpu.memory_space<vmem>>, vector<8x16x66xf32>
    tpu.vector_store %arg4[%c0_6, %c0_7, %c0_8], %9 {strides = array<i32>} : memref<8x66x66xf32, #tpu.memory_space<vmem>>, vector<8x16x66xf32>,
    %11 = vector.extract_strided_slice %9 {offsets = [0, 12, 0], sizes = [8, 4, 66], strides = [1, 1, 1]} : vector<8x16x66xf32> to vector<8x4x66xf32>
    %12 = vector.extract_strided_slice %9 {offsets = [0, 0, 0], sizes = [8, 4, 66], strides = [1, 1, 1]} : vector<8x16x66xf32> to vector<8x4x66xf32>
    %13 = vector.extract_strided_slice %2 {offsets = [0, 0], sizes = [25, 1], strides = [1, 1]} : vector<50x4xf32> to vector<25x1xf32>
    %14 = vector.shape_cast %13 : vector<25x1xf32> to vector<1x25x1xf32>
    %15 = vector.extract_strided_slice %2 {offsets = [25, 0], sizes = [25, 1], strides = [1, 1]} : vector<50x4xf32> to vector<25x1xf32>
    %16 = vector.shape_cast %15 : vector<25x1xf32> to vector<1x25x1xf32>
    %17 = vector.extract_strided_slice %11 {offsets = [0, 0, 0], sizes = [8, 1, 66], strides = [1, 1, 1]} : vector<8x4x66xf32> to vector<8x1x66xf32>
    %18 = vector.extract_strided_slice %12 {offsets = [0, 0, 0], sizes = [8, 1, 66], strides = [1, 1, 1]} : vector<8x4x66xf32> to vector<8x1x66xf32>
    %19 = vector.broadcast %14 : vector<1x25x1xf32> to vector<8x25x66xf32>
    %20 = vector.broadcast %17 : vector<8x1x66xf32> to vector<8x25x66xf32>
    %21 = arith.mulf %19, %20 : vector<8x25x66xf32>
    %22 = vector.broadcast %16 : vector<1x25x1xf32> to vector<8x25x66xf32>
    %23 = vector.broadcast %18 : vector<8x1x66xf32> to vector<8x25x66xf32>
    %24 = arith.mulf %22, %23 : vector<8x25x66xf32>
    %25 = vector.extract_strided_slice %2 {offsets = [0, 1], sizes = [25, 1], strides = [1, 1]} : vector<50x4xf32> to vector<25x1xf32>
    %26 = vector.shape_cast %25 : vector<25x1xf32> to vector<1x25x1xf32>
    %27 = vector.extract_strided_slice %2 {offsets = [25, 1], sizes = [25, 1], strides = [1, 1]} : vector<50x4xf32> to vector<25x1xf32>
    %28 = vector.shape_cast %27 : vector<25x1xf32> to vector<1x25x1xf32>
    %29 = vector.extract_strided_slice %11 {offsets = [0, 1, 0], sizes = [8, 1, 66], strides = [1, 1, 1]} : vector<8x4x66xf32> to vector<8x1x66xf32>
    %30 = vector.extract_strided_slice %12 {offsets = [0, 1, 0], sizes = [8, 1, 66], strides = [1, 1, 1]} : vector<8x4x66xf32> to vector<8x1x66xf32>
    %31 = vector.broadcast %26 : vector<1x25x1xf32> to vector<8x25x66xf32>
    %32 = vector.broadcast %29 : vector<8x1x66xf32> to vector<8x25x66xf32>
    %33 = arith.mulf %31, %32 : vector<8x25x66xf32>
    %34 = vector.broadcast %28 : vector<1x25x1xf32> to vector<8x25x66xf32>
    %35 = vector.broadcast %30 : vector<8x1x66xf32> to vector<8x25x66xf32>
    %36 = arith.mulf %34, %35 : vector<8x25x66xf32>
    %37 = arith.addf %21, %33 : vector<8x25x66xf32>
    %38 = arith.addf %24, %36 : vector<8x25x66xf32>
    %39 = vector.extract_strided_slice %2 {offsets = [0, 2], sizes = [25, 1], strides = [1, 1]} : vector<50x4xf32> to vector<25x1xf32>
    %40 = vector.shape_cast %39 : vector<25x1xf32> to vector<1x25x1xf32>
    %41 = vector.extract_strided_slice %2 {offsets = [25, 2], sizes = [25, 1], strides = [1, 1]} : vector<50x4xf32> to vector<25x1xf32>
    %42 = vector.shape_cast %41 : vector<25x1xf32> to vector<1x25x1xf32>
    %43 = vector.extract_strided_slice %11 {offsets = [0, 2, 0], sizes = [8, 1, 66], strides = [1, 1, 1]} : vector<8x4x66xf32> to vector<8x1x66xf32>
    %44 = vector.extract_strided_slice %12 {offsets = [0, 2, 0], sizes = [8, 1, 66], strides = [1, 1, 1]} : vector<8x4x66xf32> to vector<8x1x66xf32>
    %45 = vector.broadcast %40 : vector<1x25x1xf32> to vector<8x25x66xf32>
    %46 = vector.broadcast %43 : vector<8x1x66xf32> to vector<8x25x66xf32>
    %47 = arith.mulf %45, %46 : vector<8x25x66xf32>
    %48 = vector.broadcast %42 : vector<1x25x1xf32> to vector<8x25x66xf32>
    %49 = vector.broadcast %44 : vector<8x1x66xf32> to vector<8x25x66xf32>
    %50 = arith.mulf %48, %49 : vector<8x25x66xf32>
    %51 = arith.addf %37, %47 : vector<8x25x66xf32>
    %52 = arith.addf %38, %50 : vector<8x25x66xf32>
    %53 = vector.extract_strided_slice %2 {offsets = [0, 3], sizes = [25, 1], strides = [1, 1]} : vector<50x4xf32> to vector<25x1xf32>
    %54 = vector.shape_cast %53 : vector<25x1xf32> to vector<1x25x1xf32>
    %55 = vector.extract_strided_slice %2 {offsets = [25, 3], sizes = [25, 1], strides = [1, 1]} : vector<50x4xf32> to vector<25x1xf32>
    %56 = vector.shape_cast %55 : vector<25x1xf32> to vector<1x25x1xf32>
    %57 = vector.extract_strided_slice %11 {offsets = [0, 3, 0], sizes = [8, 1, 66], strides = [1, 1, 1]} : vector<8x4x66xf32> to vector<8x1x66xf32>
    %58 = vector.extract_strided_slice %12 {offsets = [0, 3, 0], sizes = [8, 1, 66], strides = [1, 1, 1]} : vector<8x4x66xf32> to vector<8x1x66xf32>
    %59 = vector.broadcast %54 : vector<1x25x1xf32> to vector<8x25x66xf32>
    %60 = vector.broadcast %57 : vector<8x1x66xf32> to vector<8x25x66xf32>
    %61 = arith.mulf %59, %60 : vector<8x25x66xf32>
    %62 = vector.broadcast %56 : vector<1x25x1xf32> to vector<8x25x66xf32>
    %63 = vector.broadcast %58 : vector<8x1x66xf32> to vector<8x25x66xf32>
    %64 = arith.mulf %62, %63 : vector<8x25x66xf32>
    %65 = arith.addf %51, %61 : vector<8x25x66xf32>
    %66 = arith.addf %52, %64 : vector<8x25x66xf32>
    %c0_9 = arith.constant 0 : index
    %c16 = arith.constant 16 : index
    %c0_10 = arith.constant 0 : index
    %67 = vector.load %arg4[%c0_9, %c16, %c0_10] : memref<8x66x66xf32, #tpu.memory_space<vmem>>, vector<8x25x66xf32>
    tpu.vector_store %arg4[%c0_9, %c16, %c0_10], %65 {strides = array<i32>} : memref<8x66x66xf32, #tpu.memory_space<vmem>>, vector<8x25x66xf32>,
    %c0_11 = arith.constant 0 : index
    %c41 = arith.constant 41 : index
    %c0_12 = arith.constant 0 : index
    %68 = vector.load %arg4[%c0_11, %c41, %c0_12] : memref<8x66x66xf32, #tpu.memory_space<vmem>>, vector<8x25x66xf32>
    tpu.vector_store %arg4[%c0_11, %c41, %c0_12], %66 {strides = array<i32>} : memref<8x66x66xf32, #tpu.memory_space<vmem>>, vector<8x25x66xf32>,
    return
  }
  func.func @transform_0(%arg0: i32) -> (i32, i32, i32) {
    %c0_i32 = arith.constant 0 : i32
    %c0_i32_0 = arith.constant 0 : i32
    %c0_i32_1 = arith.constant 0 : i32
    return %arg0, %c0_i32, %c0_i32_0 : i32, i32, i32
  }
  func.func @transform_1(%arg0: i32) -> (i32, i32) {
    %c0_i32 = arith.constant 0 : i32
    %c0_i32_0 = arith.constant 0 : i32
    %c0_i32_1 = arith.constant 0 : i32
    return %c0_i32, %c0_i32_0 : i32, i32
  }
  func.func @transform_2(%arg0: i32) -> (i32, i32) {
    %c0_i32 = arith.constant 0 : i32
    %c0_i32_0 = arith.constant 0 : i32
    %c0_i32_1 = arith.constant 0 : i32
    return %c0_i32, %c0_i32_0 : i32, i32
  }
  func.func @transform_3(%arg0: i32) -> (i32, i32, i32) {
    %c0_i32 = arith.constant 0 : i32
    %c0_i32_0 = arith.constant 0 : i32
    %c0_i32_1 = arith.constant 0 : i32
    return %arg0, %c0_i32, %c0_i32_0 : i32, i32, i32
  }
}

</mosaic_0001>

<llo_original>
// kernel: tpu_custom_call.1
$region0: #{tpu_custom_call.1}
  #allocation0 [shape = 'u32[]', space=smem, size = 0x4, offset = 0x4, fixed_abs, tag = 'smem constant byte address 0x4 - core index']
  #allocation1 [shape = 'u32[144,128]{1,0:T(1,128)}', space=vmem, size = 0x12000, scoped, tag = 'internal scratch']
  %s0 = inlined_call_operand.hbm [shape: f32[8,16,16], index: 0, kind: input, shape index: {}]
  %s1 = inlined_call_operand.vmem [shape: f32[8,50], index: 1, kind: input, shape index: {}]
  %s2 = inlined_call_operand.vmem [shape: f32[50,4], index: 2, kind: input, shape index: {}]
  %s3 = inlined_call_operand.vmem [shape: f32[8,66,66], index: 3, kind: output, shape index: {}]
  %s4 = sld [smem:[#allocation0]]
  $region26: #{tpu_custom_call.1} parent=0
    _
  %s6 = ssub.s32 1, %s4
  %s7 = scalar_select 0, %s6, %s4
  $region1: #{tpu_custom_call.1} parent=0
    #allocation2 [shape = 'u8[65536]{0}', space=vmem, size = 0x10000, scoped, tag = 'input window, operand 0, single buffered']
    #allocation3 [shape = 's32[1]{0}', space=sflag, size = 0x4, scoped, tag = 'scoped memory for tpu_custom_call.1']
    %8 = vsyncpa [#allocation3], 0
    // Predicated region
    $region2: #{tpu_custom_call.1} parent=1 // pred_check
      _
    $region3: #{tpu_custom_call.1} parent=1 // pred_check_branch
      %10 = sbr.rel (0) target = $region5
    $region4: #{tpu_custom_call.1} parent=1 // pred_region
      %s12 = ssub.s32 2048, 2048
      %13 = vsyncadd [#allocation3], %s12
      %s14 = sshll.u32 [#allocation2], 4
      %s15 = int_to_ptr.vmem [resolvable:$true] %s14
      %20 = dma.hbm_to_vmem [thread:$0]  %s0, 2048, %s15, [#allocation3], 128, 128, 8
    $region5: #{tpu_custom_call.1} parent=1 // pred_fallthru
      _
    // Predicated region
    $region6: #{tpu_custom_call.1} parent=1 // pred_check
      _
    $region7: #{tpu_custom_call.1} parent=1 // pred_check_branch
      %22 = sbr.rel (0) target = $region9
    $region8: #{tpu_custom_call.1} parent=1 // pred_region
      _
    $region9: #{tpu_custom_call.1} parent=1 // pred_fallthru
      _
    // Predicated region
    $region10: #{tpu_custom_call.1} parent=1 // pred_check
      _
    $region11: #{tpu_custom_call.1} parent=1 // pred_check_branch
      %24 = sbr.rel (0) target = $region13
    $region12: #{tpu_custom_call.1} parent=1 // pred_region
      _
    $region13: #{tpu_custom_call.1} parent=1 // pred_fallthru
      _
    // Predicated region
    $region14: #{tpu_custom_call.1} parent=1 // pred_check
      _
    $region15: #{tpu_custom_call.1} parent=1 // pred_check_branch
      %26 = sbr.rel (0) target = $region17
    $region16: #{tpu_custom_call.1} parent=1 // pred_region
      %27 = dma.done [#allocation3], 2048
    $region17: #{tpu_custom_call.1} parent=1 // pred_fallthru
      _
    %v28 = vld [vmem:[#allocation2] sm:$0xff]
    %v29 = vld [vmem:[#allocation2 + $0x8] sm:$0xff]
    %v30 = vld [vmem:[#allocation2 + $0x10] sm:$0xff]
    %v31 = vld [vmem:[#allocation2 + $0x18] sm:$0xff]
    %v32 = vld [vmem:[#allocation2 + $0x20] sm:$0xff]
    %v33 = vld [vmem:[#allocation2 + $0x28] sm:$0xff]
    %v34 = vld [vmem:[#allocation2 + $0x30] sm:$0xff]
    %v35 = vld [vmem:[#allocation2 + $0x38] sm:$0xff]
    %v36 = vld [vmem:[#allocation2 + $0x40] sm:$0xff]
    %v37 = vld [vmem:[#allocation2 + $0x48] sm:$0xff]
    %v38 = vld [vmem:[#allocation2 + $0x50] sm:$0xff]
    %v39 = vld [vmem:[#allocation2 + $0x58] sm:$0xff]
    %v40 = vld [vmem:[#allocation2 + $0x60] sm:$0xff]
    %v41 = vld [vmem:[#allocation2 + $0x68] sm:$0xff]
    %v42 = vld [vmem:[#allocation2 + $0x70] sm:$0xff]
    %v43 = vld [vmem:[#allocation2 + $0x78] sm:$0xff]
    %v44 = vld [vmem:[%s1] sm:$0xff]
    %v45 = vld [vmem:[%s2] sm:$0xff]
    %v46 = vld [vmem:[%s2 + $0x8] sm:$0xff]
    %v47 = vld [vmem:[%s2 + $0x10] sm:$0xff]
    %v48 = vld [vmem:[%s2 + $0x18] sm:$0xff]
    %v49 = vld [vmem:[%s2 + $0x20] sm:$0xff]
    %v50 = vld [vmem:[%s2 + $0x28] sm:$0xff]
    %v51 = vld [vmem:[%s2 + $0x30] sm:$0x3]
    %68 = vrot.lane.b32.xlu0 %v28, 116
    %v69 = vpop.permute.xlu0 %68
    %70 = vrot.lane.b32.xlu0 %v29, 116
    %v71 = vpop.permute.xlu0 %70
    %72 = vrot.lane.b32.xlu0 %v30, 116
    %v73 = vpop.permute.xlu0 %72
    %74 = vrot.lane.b32.xlu0 %v31, 116
    %v75 = vpop.permute.xlu0 %74
    %76 = vrot.lane.b32.xlu0 %v32, 116
    %v77 = vpop.permute.xlu0 %76
    %78 = vrot.lane.b32.xlu0 %v33, 116
    %v79 = vpop.permute.xlu0 %78
    %80 = vrot.lane.b32.xlu0 %v34, 116
    %v81 = vpop.permute.xlu0 %80
    %82 = vrot.lane.b32.xlu0 %v35, 116
    %v83 = vpop.permute.xlu0 %82
    %84 = vrot.lane.b32.xlu0 %v36, 116
    %v85 = vpop.permute.xlu0 %84
    %86 = vrot.lane.b32.xlu0 %v37, 116
    %v87 = vpop.permute.xlu0 %86
    %88 = vrot.lane.b32.xlu0 %v38, 116
    %v89 = vpop.permute.xlu0 %88
    %90 = vrot.lane.b32.xlu0 %v39, 116
    %v91 = vpop.permute.xlu0 %90
    %92 = vrot.lane.b32.xlu0 %v40, 116
    %v93 = vpop.permute.xlu0 %92
    %94 = vrot.lane.b32.xlu0 %v41, 116
    %v95 = vpop.permute.xlu0 %94
    %96 = vrot.lane.b32.xlu0 %v42, 116
    %v97 = vpop.permute.xlu0 %96
    %98 = vrot.lane.b32.xlu0 %v43, 116
    %v99 = vpop.permute.xlu0 %98
    %116 = vrot.lane.b32.xlu0 %v28, 4
    %v117 = vpop.permute.xlu0 %116
    %118 = vrot.lane.b32.xlu0 %v29, 4
    %v119 = vpop.permute.xlu0 %118
    %120 = vrot.lane.b32.xlu0 %v30, 4
    %v121 = vpop.permute.xlu0 %120
    %122 = vrot.lane.b32.xlu0 %v31, 4
    %v123 = vpop.permute.xlu0 %122
    %124 = vrot.lane.b32.xlu0 %v32, 4
    %v125 = vpop.permute.xlu0 %124
    %126 = vrot.lane.b32.xlu0 %v33, 4
    %v127 = vpop.permute.xlu0 %126
    %128 = vrot.lane.b32.xlu0 %v34, 4
    %v129 = vpop.permute.xlu0 %128
    %130 = vrot.lane.b32.xlu0 %v35, 4
    %v131 = vpop.permute.xlu0 %130
    %132 = vrot.lane.b32.xlu0 %v36, 4
    %v133 = vpop.permute.xlu0 %132
    %134 = vrot.lane.b32.xlu0 %v37, 4
    %v135 = vpop.permute.xlu0 %134
    %136 = vrot.lane.b32.xlu0 %v38, 4
    %v137 = vpop.permute.xlu0 %136
    %138 = vrot.lane.b32.xlu0 %v39, 4
    %v139 = vpop.permute.xlu0 %138
    %140 = vrot.lane.b32.xlu0 %v40, 4
    %v141 = vpop.permute.xlu0 %140
    %142 = vrot.lane.b32.xlu0 %v41, 4
    %v143 = vpop.permute.xlu0 %142
    %144 = vrot.lane.b32.xlu0 %v42, 4
    %v145 = vpop.permute.xlu0 %144
    %146 = vrot.lane.b32.xlu0 %v43, 4
    %v147 = vpop.permute.xlu0 %146
    %vm164 = vcmask 31744
    %v165 = vsel %vm164, %v69, %v117
    %v166 = vsel %vm164, %v71, %v119
    %v167 = vsel %vm164, %v73, %v121
    %v168 = vsel %vm164, %v75, %v123
    %v169 = vsel %vm164, %v77, %v125
    %v170 = vsel %vm164, %v79, %v127
    %v171 = vsel %vm164, %v81, %v129
    %v172 = vsel %vm164, %v83, %v131
    %v173 = vsel %vm164, %v85, %v133
    %v174 = vsel %vm164, %v87, %v135
    %v175 = vsel %vm164, %v89, %v137
    %v176 = vsel %vm164, %v91, %v139
    %v177 = vsel %vm164, %v93, %v141
    %v178 = vsel %vm164, %v95, %v143
    %v179 = vsel %vm164, %v97, %v145
    %v180 = vsel %vm164, %v99, %v147
    %vm181 = vcmask 64512
    %v183 = vsel %vm181, %v165, 0
    %v186 = vsel %vm181, %v166, 0
    %v189 = vsel %vm181, %v167, 0
    %v192 = vsel %vm181, %v168, 0
    %v195 = vsel %vm181, %v169, 0
    %v198 = vsel %vm181, %v170, 0
    %v201 = vsel %vm181, %v171, 0
    %v204 = vsel %vm181, %v172, 0
    %v207 = vsel %vm181, %v173, 0
    %v210 = vsel %vm181, %v174, 0
    %v213 = vsel %vm181, %v175, 0
    %v216 = vsel %vm181, %v176, 0
    %v219 = vsel %vm181, %v177, 0
    %v222 = vsel %vm181, %v178, 0
    %v225 = vsel %vm181, %v179, 0
    %v228 = vsel %vm181, %v180, 0
    %230 = vmatprep.subr.mxu0 0.0
    %231 = vmatpush1.msra.mxu0 %v44
    %232 = vmatprep.subr.mxu0 0.0
    %233 = vmatpush1.msra.mxu0 0.0
    %234 = vmatprep.subr.mxu0 0.0
    %235 = vmatpush1.msra.mxu0 0.0
    %236 = vmatprep.subr.mxu0 0.0
    %237 = vmatpush1.msra.mxu0 0.0
    %238 = vmatprep.subr.mxu0 0.0
    %239 = vmatpush1.msra.mxu0 0.0
    %240 = vmatprep.subr.mxu0 0.0
    %241 = vmatpush1.msra.mxu0 0.0
    %242 = vmatprep.subr.mxu0 0.0
    %243 = vmatpush1.msra.mxu0 0.0
    %244 = vmatprep.subr.mxu0 0.0
    %245 = vmatpush1.msra.mxu0 0.0
    %246 = vmatprep.subr.mxu0 0.0
    %247 = vmatpush1.msra.mxu0 0.0
    %248 = vmatprep.subr.mxu0 0.0
    %249 = vmatpush1.msra.mxu0 0.0
    %250 = vmatprep.subr.mxu0 0.0
    %251 = vmatpush1.msra.mxu0 0.0
    %252 = vmatprep.subr.mxu0 0.0
    %253 = vmatpush1.msra.mxu0 0.0
    %254 = vmatprep.subr.mxu0 0.0
    %255 = vmatpush1.msra.mxu0 0.0
    %256 = vmatprep.subr.mxu0 0.0
    %257 = vmatpush1.msra.mxu0 0.0
    %258 = vmatprep.subr.mxu0 0.0
    %259 = vmatpush1.msra.mxu0 0.0
    %260 = vmatprep.subr.mxu0 0.0
    %261 = vmatpush1.msra.mxu0 0.0
    %262 = vmatprep.subr.mxu0 0.0
    %263 = vmatpush1.msra.mxu0 0.0
    %264 = vmatprep.subr.mxu0 0.0
    %265 = vmatpush1.msra.mxu0 0.0
    %266 = vmatprep.subr.mxu0 0.0
    %267 = vmatpush1.msra.mxu0 0.0
    %268 = vmatprep.subr.mxu0 0.0
    %269 = vmatpush1.msra.mxu0 0.0
    %270 = vmatprep.subr.mxu0 0.0
    %271 = vmatpush1.msra.mxu0 0.0
    %272 = vmatprep.subr.mxu0 0.0
    %273 = vmatpush1.msra.mxu0 0.0
    %274 = vmatprep.subr.mxu0 0.0
    %275 = vmatpush1.msra.mxu0 0.0
    %276 = vmatprep.subr.mxu0 0.0
    %277 = vmatpush1.msra.mxu0 0.0
    %278 = vmatprep.subr.mxu0 0.0
    %279 = vmatpush1.msra.mxu0 0.0
    %280 = vmatprep.subr.mxu0 0.0
    %281 = vmatpush1.msra.mxu0 0.0
    %282 = vmatprep.subr.mxu0 0.0
    %283 = vmatpush1.msra.mxu0 0.0
    %284 = vmatprep.subr.mxu0 0.0
    %285 = vmatpush1.msra.mxu0 0.0
    %286 = vmatprep.subr.mxu0 0.0
    %287 = vmatpush1.msra.mxu0 0.0
    %288 = vmatprep.subr.mxu0 0.0
    %289 = vmatpush1.msra.mxu0 0.0
    %290 = vmatprep.subr.mxu0 0.0
    %291 = vmatpush1.msra.mxu0 0.0
    %292 = vmatprep.subr.mxu0 0.0
    %293 = vmatpush1.msra.mxu0 0.0
    %294 = vmatprep.mubr.f32.mxu0 0.0
    %295 = vmatmul.mubr.f32.gmra.mrb[0].mxu0 %v183
    %v296 = vpop.f32.mrb[0].mxu0
    %v297 = vadd.f32 0.0, %v296
    %v298 = vpop.f32.mrb[0].mxu0
    %299 = vmatprep.mubr.f32.mxu0 0.0
    %300 = vmatmul.mubr.f32.gmra.mrb[0].mxu0 %v186
    %v301 = vpop.f32.mrb[0].mxu0
    %v302 = vadd.f32 0.0, %v301
    %v303 = vpop.f32.mrb[0].mxu0
    %304 = vmatprep.mubr.f32.mxu0 0.0
    %305 = vmatmul.mubr.f32.gmra.mrb[0].mxu0 %v189
    %v306 = vpop.f32.mrb[0].mxu0
    %v307 = vadd.f32 0.0, %v306
    %v308 = vpop.f32.mrb[0].mxu0
    %309 = vmatprep.mubr.f32.mxu0 0.0
    %310 = vmatmul.mubr.f32.gmra.mrb[0].mxu0 %v192
    %v311 = vpop.f32.mrb[0].mxu0
    %v312 = vadd.f32 0.0, %v311
    %v313 = vpop.f32.mrb[0].mxu0
    %314 = vmatprep.mubr.f32.mxu0 0.0
    %315 = vmatmul.mubr.f32.gmra.mrb[0].mxu0 %v195
    %v316 = vpop.f32.mrb[0].mxu0
    %v317 = vadd.f32 0.0, %v316
    %v318 = vpop.f32.mrb[0].mxu0
    %319 = vmatprep.mubr.f32.mxu0 0.0
    %320 = vmatmul.mubr.f32.gmra.mrb[0].mxu0 %v198
    %v321 = vpop.f32.mrb[0].mxu0
    %v322 = vadd.f32 0.0, %v321
    %v323 = vpop.f32.mrb[0].mxu0
    %324 = vmatprep.mubr.f32.mxu0 0.0
    %325 = vmatmul.mubr.f32.gmra.mrb[0].mxu0 %v201
    %v326 = vpop.f32.mrb[0].mxu0
    %v327 = vadd.f32 0.0, %v326
    %v328 = vpop.f32.mrb[0].mxu0
    %329 = vmatprep.mubr.f32.mxu0 0.0
    %330 = vmatmul.mubr.f32.gmra.mrb[0].mxu0 %v204
    %v331 = vpop.f32.mrb[0].mxu0
    %v332 = vadd.f32 0.0, %v331
    %v333 = vpop.f32.mrb[0].mxu0
    %334 = vmatprep.mubr.f32.mxu0 0.0
    %335 = vmatmul.mubr.f32.gmra.mrb[0].mxu0 %v207
    %v336 = vpop.f32.mrb[0].mxu0
    %v337 = vadd.f32 0.0, %v336
    %v338 = vpop.f32.mrb[0].mxu0
    %339 = vmatprep.mubr.f32.mxu0 0.0
    %340 = vmatmul.mubr.f32.gmra.mrb[0].mxu0 %v210
    %v341 = vpop.f32.mrb[0].mxu0
    %v342 = vadd.f32 0.0, %v341
    %v343 = vpop.f32.mrb[0].mxu0
    %344 = vmatprep.mubr.f32.mxu0 0.0
    %345 = vmatmul.mubr.f32.gmra.mrb[0].mxu0 %v213
    %v346 = vpop.f32.mrb[0].mxu0
    %v347 = vadd.f32 0.0, %v346
    %v348 = vpop.f32.mrb[0].mxu0
    %349 = vmatprep.mubr.f32.mxu0 0.0
    %350 = vmatmul.mubr.f32.gmra.mrb[0].mxu0 %v216
    %v351 = vpop.f32.mrb[0].mxu0
    %v352 = vadd.f32 0.0, %v351
    %v353 = vpop.f32.mrb[0].mxu0
    %354 = vmatprep.mubr.f32.mxu0 0.0
    %355 = vmatmul.mubr.f32.gmra.mrb[0].mxu0 %v219
    %v356 = vpop.f32.mrb[0].mxu0
    %v357 = vadd.f32 0.0, %v356
    %v358 = vpop.f32.mrb[0].mxu0
    %359 = vmatprep.mubr.f32.mxu0 0.0
    %360 = vmatmul.mubr.f32.gmra.mrb[0].mxu0 %v222
    %v361 = vpop.f32.mrb[0].mxu0
    %v362 = vadd.f32 0.0, %v361
    %v363 = vpop.f32.mrb[0].mxu0
    %364 = vmatprep.mubr.f32.mxu0 0.0
    %365 = vmatmul.mubr.f32.gmra.mrb[0].mxu0 %v225
    %v366 = vpop.f32.mrb[0].mxu0
    %v367 = vadd.f32 0.0, %v366
    %v368 = vpop.f32.mrb[0].mxu0
    %369 = vmatprep.mubr.f32.mxu0 0.0
    %370 = vmatmul.mubr.f32.gmra.mrb[0].mxu0 %v228
    %v371 = vpop.f32.mrb[0].mxu0
    %v372 = vadd.f32 0.0, %v371
    %v373 = vpop.f32.mrb[0].mxu0
    %374 = vdwg.mxu0
    %391 = vrot.lane.b32.xlu0 %v297, 16
    %v392 = vpop.permute.xlu0 %391
    %393 = vrot.lane.b32.xlu0 %v302, 16
    %v394 = vpop.permute.xlu0 %393
    %395 = vrot.lane.b32.xlu0 %v307, 16
    %v396 = vpop.permute.xlu0 %395
    %397 = vrot.lane.b32.xlu0 %v312, 16
    %v398 = vpop.permute.xlu0 %397
    %399 = vrot.lane.b32.xlu0 %v317, 16
    %v400 = vpop.permute.xlu0 %399
    %401 = vrot.lane.b32.xlu0 %v322, 16
    %v402 = vpop.permute.xlu0 %401
    %403 = vrot.lane.b32.xlu0 %v327, 16
    %v404 = vpop.permute.xlu0 %403
    %405 = vrot.lane.b32.xlu0 %v332, 16
    %v406 = vpop.permute.xlu0 %405
    %407 = vrot.lane.b32.xlu0 %v337, 16
    %v408 = vpop.permute.xlu0 %407
    %409 = vrot.lane.b32.xlu0 %v342, 16
    %v410 = vpop.permute.xlu0 %409
    %411 = vrot.lane.b32.xlu0 %v347, 16
    %v412 = vpop.permute.xlu0 %411
    %413 = vrot.lane.b32.xlu0 %v352, 16
    %v414 = vpop.permute.xlu0 %413
    %415 = vrot.lane.b32.xlu0 %v357, 16
    %v416 = vpop.permute.xlu0 %415
    %417 = vrot.lane.b32.xlu0 %v362, 16
    %v418 = vpop.permute.xlu0 %417
    %419 = vrot.lane.b32.xlu0 %v367, 16
    %v420 = vpop.permute.xlu0 %419
    %421 = vrot.lane.b32.xlu0 %v372, 16
    %v422 = vpop.permute.xlu0 %421
    %vm439 = vcmask 130048
    %v440 = vsel %vm439, %v28, %v392
    %v441 = vsel %vm439, %v29, %v394
    %v442 = vsel %vm439, %v30, %v396
    %v443 = vsel %vm439, %v31, %v398
    %v444 = vsel %vm439, %v32, %v400
    %v445 = vsel %vm439, %v33, %v402
    %v446 = vsel %vm439, %v34, %v404
    %v447 = vsel %vm439, %v35, %v406
    %v448 = vsel %vm439, %v36, %v408
    %v449 = vsel %vm439, %v37, %v410
    %v450 = vsel %vm439, %v38, %v412
    %v451 = vsel %vm439, %v39, %v414
    %v452 = vsel %vm439, %v40, %v416
    %v453 = vsel %vm439, %v41, %v418
    %v454 = vsel %vm439, %v42, %v420
    %v455 = vsel %vm439, %v43, %v422
    %vm456 = vcmask 539648
    %457 = vst.msk [vmem:[%s3] sm:$0xff] %vm456, %v440
    %458 = vst.msk [vmem:[%s3 + $0x8] sm:$0xff] %vm456, %v441
    %459 = vst.msk [vmem:[%s3 + $0x48] sm:$0xff] %vm456, %v442
    %460 = vst.msk [vmem:[%s3 + $0x50] sm:$0xff] %vm456, %v443
    %461 = vst.msk [vmem:[%s3 + $0x90] sm:$0xff] %vm456, %v444
    %462 = vst.msk [vmem:[%s3 + $0x98] sm:$0xff] %vm456, %v445
    %463 = vst.msk [vmem:[%s3 + $0xd8] sm:$0xff] %vm456, %v446
    %464 = vst.msk [vmem:[%s3 + $0xe0] sm:$0xff] %vm456, %v447
    %465 = vst.msk [vmem:[%s3 + $0x120] sm:$0xff] %vm456, %v448
    %466 = vst.msk [vmem:[%s3 + $0x128] sm:$0xff] %vm456, %v449
    %467 = vst.msk [vmem:[%s3 + $0x168] sm:$0xff] %vm456, %v450
    %468 = vst.msk [vmem:[%s3 + $0x170] sm:$0xff] %vm456, %v451
    %469 = vst.msk [vmem:[%s3 + $0x1b0] sm:$0xff] %vm456, %v452
    %470 = vst.msk [vmem:[%s3 + $0x1b8] sm:$0xff] %vm456, %v453
    %471 = vst.msk [vmem:[%s3 + $0x1f8] sm:$0xff] %vm456, %v454
    %472 = vst.msk [vmem:[%s3 + $0x200] sm:$0xff] %vm456, %v455
    %474 = vset.pattern.permute.xlu0 0
    %475 = vperm.xlu0 %474, %v45
    %v476 = vpop.permute.xlu0 %475
    %479 = vset.pattern.permute.xlu0 0
    %480 = vperm.xlu0 %479, %v46
    %v481 = vpop.permute.xlu0 %480
    %484 = vset.pattern.permute.xlu0 0
    %485 = vperm.xlu0 %484, %v47
    %v486 = vpop.permute.xlu0 %485
    %489 = vset.pattern.permute.xlu0 0
    %490 = vperm.xlu0 %489, %v48
    %v491 = vpop.permute.xlu0 %490
    %v493 = vlaneseq
    %v494 = vshrl.u32 %v493, 7
    %v495 = vsub.s32 4, %v494
    %v496 = vrot.slane %v441, %v495
    %v497 = vlaneseq
    %v498 = vshrl.u32 %v497, 7
    %v499 = vsub.s32 4, %v498
    %v500 = vrot.slane %v443, %v499
    %v501 = vlaneseq
    %v502 = vshrl.u32 %v501, 7
    %v503 = vsub.s32 4, %v502
    %v504 = vrot.slane %v445, %v503
    %v505 = vlaneseq
    %v506 = vshrl.u32 %v505, 7
    %v507 = vsub.s32 4, %v506
    %v508 = vrot.slane %v447, %v507
    %v509 = vlaneseq
    %v510 = vshrl.u32 %v509, 7
    %v511 = vsub.s32 4, %v510
    %v512 = vrot.slane %v449, %v511
    %v513 = vlaneseq
    %v514 = vshrl.u32 %v513, 7
    %v515 = vsub.s32 4, %v514
    %v516 = vrot.slane %v451, %v515
    %v517 = vlaneseq
    %v518 = vshrl.u32 %v517, 7
    %v519 = vsub.s32 4, %v518
    %v520 = vrot.slane %v453, %v519
    %v521 = vlaneseq
    %v522 = vshrl.u32 %v521, 7
    %v523 = vsub.s32 4, %v522
    %v524 = vrot.slane %v455, %v523
    %v525 = vmul.f32 %v476, %v496
    %v526 = vmul.f32 %v481, %v496
    %v527 = vmul.f32 %v486, %v496
    %v528 = vmul.f32 %v491, %v496
    %v529 = vmul.f32 %v476, %v500
    %v530 = vmul.f32 %v481, %v500
    %v531 = vmul.f32 %v486, %v500
    %v532 = vmul.f32 %v491, %v500
    %v533 = vmul.f32 %v476, %v504
    %v534 = vmul.f32 %v481, %v504
    %v535 = vmul.f32 %v486, %v504
    %v536 = vmul.f32 %v491, %v504
    %v537 = vmul.f32 %v476, %v508
    %v538 = vmul.f32 %v481, %v508
    %v539 = vmul.f32 %v486, %v508
    %v540 = vmul.f32 %v491, %v508
    %v541 = vmul.f32 %v476, %v512
    %v542 = vmul.f32 %v481, %v512
    %v543 = vmul.f32 %v486, %v512
    %v544 = vmul.f32 %v491, %v512
    %v545 = vmul.f32 %v476, %v516
    %v546 = vmul.f32 %v481, %v516
    %v547 = vmul.f32 %v486, %v516
    %v548 = vmul.f32 %v491, %v516
    %v549 = vmul.f32 %v476, %v520
    %v550 = vmul.f32 %v481, %v520
    %v551 = vmul.f32 %v486, %v520
    %v552 = vmul.f32 %v491, %v520
    %v553 = vmul.f32 %v476, %v524
    %v554 = vmul.f32 %v481, %v524
    %v555 = vmul.f32 %v486, %v524
    %v556 = vmul.f32 %v491, %v524
    %558 = vset.pattern.permute.xlu0 0
    %559 = vperm.xlu0 %558, %v49
    %v560 = vpop.permute.xlu0 %559
    %563 = vset.pattern.permute.xlu0 0
    %564 = vperm.xlu0 %563, %v50
    %v565 = vpop.permute.xlu0 %564
    %568 = vset.pattern.permute.xlu0 0
    %569 = vperm.xlu0 %568, %v51
    %v570 = vpop.permute.xlu0 %569
    %v572 = vlaneseq
    %v573 = vshrl.u32 %v572, 7
    %v574 = vsub.s32 0, %v573
    %v575 = vrot.slane %v440, %v574
    %v576 = vlaneseq
    %v577 = vshrl.u32 %v576, 7
    %v578 = vsub.s32 0, %v577
    %v579 = vrot.slane %v442, %v578
    %v580 = vlaneseq
    %v581 = vshrl.u32 %v580, 7
    %v582 = vsub.s32 0, %v581
    %v583 = vrot.slane %v444, %v582
    %v584 = vlaneseq
    %v585 = vshrl.u32 %v584, 7
    %v586 = vsub.s32 0, %v585
    %v587 = vrot.slane %v446, %v586
    %v588 = vlaneseq
    %v589 = vshrl.u32 %v588, 7
    %v590 = vsub.s32 0, %v589
    %v591 = vrot.slane %v448, %v590
    %v592 = vlaneseq
    %v593 = vshrl.u32 %v592, 7
    %v594 = vsub.s32 0, %v593
    %v595 = vrot.slane %v450, %v594
    %v596 = vlaneseq
    %v597 = vshrl.u32 %v596, 7
    %v598 = vsub.s32 0, %v597
    %v599 = vrot.slane %v452, %v598
    %v600 = vlaneseq
    %v601 = vshrl.u32 %v600, 7
    %v602 = vsub.s32 0, %v601
    %v603 = vrot.slane %v454, %v602
    %v604 = vmul.f32 %v491, %v575
    %v605 = vmul.f32 %v560, %v575
    %v606 = vmul.f32 %v565, %v575
    %v607 = vmul.f32 %v570, %v575
    %v608 = vmul.f32 %v491, %v579
    %v609 = vmul.f32 %v560, %v579
    %v610 = vmul.f32 %v565, %v579
    %v611 = vmul.f32 %v570, %v579
    %v612 = vmul.f32 %v491, %v583
    %v613 = vmul.f32 %v560, %v583
    %v614 = vmul.f32 %v565, %v583
    %v615 = vmul.f32 %v570, %v583
    %v616 = vmul.f32 %v491, %v587
    %v617 = vmul.f32 %v560, %v587
    %v618 = vmul.f32 %v565, %v587
    %v619 = vmul.f32 %v570, %v587
    %v620 = vmul.f32 %v491, %v591
    %v621 = vmul.f32 %v560, %v591
    %v622 = vmul.f32 %v565, %v591
    %v623 = vmul.f32 %v570, %v591
    %v624 = vmul.f32 %v491, %v595
    %v625 = vmul.f32 %v560, %v595
    %v626 = vmul.f32 %v565, %v595
    %v627 = vmul.f32 %v570, %v595
    %v628 = vmul.f32 %v491, %v599
    %v629 = vmul.f32 %v560, %v599
    %v630 = vmul.f32 %v565, %v599
    %v631 = vmul.f32 %v570, %v599
    %v632 = vmul.f32 %v491, %v603
    %v633 = vmul.f32 %v560, %v603
    %v634 = vmul.f32 %v565, %v603
    %v635 = vmul.f32 %v570, %v603
    %636 = vset.pattern.permute.xlu0 1
    %637 = vperm.xlu0 %636, %v45
    %v638 = vpop.permute.xlu0 %637
    %640 = vset.pattern.permute.xlu0 1
    %641 = vperm.xlu0 %640, %v46
    %v642 = vpop.permute.xlu0 %641
    %644 = vset.pattern.permute.xlu0 1
    %645 = vperm.xlu0 %644, %v47
    %v646 = vpop.permute.xlu0 %645
    %648 = vset.pattern.permute.xlu0 1
    %649 = vperm.xlu0 %648, %v48
    %v650 = vpop.permute.xlu0 %649
    %v652 = vlaneseq
    %v653 = vshrl.u32 %v652, 7
    %v654 = vsub.s32 5, %v653
    %v655 = vrot.slane %v441, %v654
    %v656 = vlaneseq
    %v657 = vshrl.u32 %v656, 7
    %v658 = vsub.s32 5, %v657
    %v659 = vrot.slane %v443, %v658
    %v660 = vlaneseq
    %v661 = vshrl.u32 %v660, 7
    %v662 = vsub.s32 5, %v661
    %v663 = vrot.slane %v445, %v662
    %v664 = vlaneseq
    %v665 = vshrl.u32 %v664, 7
    %v666 = vsub.s32 5, %v665
    %v667 = vrot.slane %v447, %v666
    %v668 = vlaneseq
    %v669 = vshrl.u32 %v668, 7
    %v670 = vsub.s32 5, %v669
    %v671 = vrot.slane %v449, %v670
    %v672 = vlaneseq
    %v673 = vshrl.u32 %v672, 7
    %v674 = vsub.s32 5, %v673
    %v675 = vrot.slane %v451, %v674
    %v676 = vlaneseq
    %v677 = vshrl.u32 %v676, 7
    %v678 = vsub.s32 5, %v677
    %v679 = vrot.slane %v453, %v678
    %v680 = vlaneseq
    %v681 = vshrl.u32 %v680, 7
    %v682 = vsub.s32 5, %v681
    %v683 = vrot.slane %v455, %v682
    %v684 = vmul.f32 %v638, %v655
    %v685 = vmul.f32 %v642, %v655
    %v686 = vmul.f32 %v646, %v655
    %v687 = vmul.f32 %v650, %v655
    %v688 = vmul.f32 %v638, %v659
    %v689 = vmul.f32 %v642, %v659
    %v690 = vmul.f32 %v646, %v659
    %v691 = vmul.f32 %v650, %v659
    %v692 = vmul.f32 %v638, %v663
    %v693 = vmul.f32 %v642, %v663
    %v694 = vmul.f32 %v646, %v663
    %v695 = vmul.f32 %v650, %v663
    %v696 = vmul.f32 %v638, %v667
    %v697 = vmul.f32 %v642, %v667
    %v698 = vmul.f32 %v646, %v667
    %v699 = vmul.f32 %v650, %v667
    %v700 = vmul.f32 %v638, %v671
    %v701 = vmul.f32 %v642, %v671
    %v702 = vmul.f32 %v646, %v671
    %v703 = vmul.f32 %v650, %v671
    %v704 = vmul.f32 %v638, %v675
    %v705 = vmul.f32 %v642, %v675
    %v706 = vmul.f32 %v646, %v675
    %v707 = vmul.f32 %v650, %v675
    %v708 = vmul.f32 %v638, %v679
    %v709 = vmul.f32 %v642, %v679
    %v710 = vmul.f32 %v646, %v679
    %v711 = vmul.f32 %v650, %v679
    %v712 = vmul.f32 %v638, %v683
    %v713 = vmul.f32 %v642, %v683
    %v714 = vmul.f32 %v646, %v683
    %v715 = vmul.f32 %v650, %v683
    %716 = vset.pattern.permute.xlu0 1
    %717 = vperm.xlu0 %716, %v49
    %v718 = vpop.permute.xlu0 %717
    %720 = vset.pattern.permute.xlu0 1
    %721 = vperm.xlu0 %720, %v50
    %v722 = vpop.permute.xlu0 %721
    %724 = vset.pattern.permute.xlu0 1
    %725 = vperm.xlu0 %724, %v51
    %v726 = vpop.permute.xlu0 %725
    %v728 = vlaneseq
    %v729 = vshrl.u32 %v728, 7
    %v730 = vsub.s32 1, %v729
    %v731 = vrot.slane %v440, %v730
    %v732 = vlaneseq
    %v733 = vshrl.u32 %v732, 7
    %v734 = vsub.s32 1, %v733
    %v735 = vrot.slane %v442, %v734
    %v736 = vlaneseq
    %v737 = vshrl.u32 %v736, 7
    %v738 = vsub.s32 1, %v737
    %v739 = vrot.slane %v444, %v738
    %v740 = vlaneseq
    %v741 = vshrl.u32 %v740, 7
    %v742 = vsub.s32 1, %v741
    %v743 = vrot.slane %v446, %v742
    %v744 = vlaneseq
    %v745 = vshrl.u32 %v744, 7
    %v746 = vsub.s32 1, %v745
    %v747 = vrot.slane %v448, %v746
    %v748 = vlaneseq
    %v749 = vshrl.u32 %v748, 7
    %v750 = vsub.s32 1, %v749
    %v751 = vrot.slane %v450, %v750
    %v752 = vlaneseq
    %v753 = vshrl.u32 %v752, 7
    %v754 = vsub.s32 1, %v753
    %v755 = vrot.slane %v452, %v754
    %v756 = vlaneseq
    %v757 = vshrl.u32 %v756, 7
    %v758 = vsub.s32 1, %v757
    %v759 = vrot.slane %v454, %v758
    %v760 = vmul.f32 %v650, %v731
    %v761 = vmul.f32 %v718, %v731
    %v762 = vmul.f32 %v722, %v731
    %v763 = vmul.f32 %v726, %v731
    %v764 = vmul.f32 %v650, %v735
    %v765 = vmul.f32 %v718, %v735
    %v766 = vmul.f32 %v722, %v735
    %v767 = vmul.f32 %v726, %v735
    %v768 = vmul.f32 %v650, %v739
    %v769 = vmul.f32 %v718, %v739
    %v770 = vmul.f32 %v722, %v739
    %v771 = vmul.f32 %v726, %v739
    %v772 = vmul.f32 %v650, %v743
    %v773 = vmul.f32 %v718, %v743
    %v774 = vmul.f32 %v722, %v743
    %v775 = vmul.f32 %v726, %v743
    %v776 = vmul.f32 %v650, %v747
    %v777 = vmul.f32 %v718, %v747
    %v778 = vmul.f32 %v722, %v747
    %v779 = vmul.f32 %v726, %v747
    %v780 = vmul.f32 %v650, %v751
    %v781 = vmul.f32 %v718, %v751
    %v782 = vmul.f32 %v722, %v751
    %v783 = vmul.f32 %v726, %v751
    %v784 = vmul.f32 %v650, %v755
    %v785 = vmul.f32 %v718, %v755
    %v786 = vmul.f32 %v722, %v755
    %v787 = vmul.f32 %v726, %v755
    %v788 = vmul.f32 %v650, %v759
    %v789 = vmul.f32 %v718, %v759
    %v790 = vmul.f32 %v722, %v759
    %v791 = vmul.f32 %v726, %v759
    %v792 = vadd.f32 %v525, %v684
    %v793 = vadd.f32 %v526, %v685
    %v794 = vadd.f32 %v527, %v686
    %v795 = vadd.f32 %v528, %v687
    %v796 = vadd.f32 %v529, %v688
    %v797 = vadd.f32 %v530, %v689
    %v798 = vadd.f32 %v531, %v690
    %v799 = vadd.f32 %v532, %v691
    %v800 = vadd.f32 %v533, %v692
    %v801 = vadd.f32 %v534, %v693
    %v802 = vadd.f32 %v535, %v694
    %v803 = vadd.f32 %v536, %v695
    %v804 = vadd.f32 %v537, %v696
    %v805 = vadd.f32 %v538, %v697
    %v806 = vadd.f32 %v539, %v698
    %v807 = vadd.f32 %v540, %v699
    %v808 = vadd.f32 %v541, %v700
    %v809 = vadd.f32 %v542, %v701
    %v810 = vadd.f32 %v543, %v702
    %v811 = vadd.f32 %v544, %v703
    %v812 = vadd.f32 %v545, %v704
    %v813 = vadd.f32 %v546, %v705
    %v814 = vadd.f32 %v547, %v706
    %v815 = vadd.f32 %v548, %v707
    %v816 = vadd.f32 %v549, %v708
    %v817 = vadd.f32 %v550, %v709
    %v818 = vadd.f32 %v551, %v710
    %v819 = vadd.f32 %v552, %v711
    %v820 = vadd.f32 %v553, %v712
    %v821 = vadd.f32 %v554, %v713
    %v822 = vadd.f32 %v555, %v714
    %v823 = vadd.f32 %v556, %v715
    %v824 = vadd.f32 %v604, %v760
    %v825 = vadd.f32 %v605, %v761
    %v826 = vadd.f32 %v606, %v762
    %v827 = vadd.f32 %v607, %v763
    %v828 = vadd.f32 %v608, %v764
    %v829 = vadd.f32 %v609, %v765
    %v830 = vadd.f32 %v610, %v766
    %v831 = vadd.f32 %v611, %v767
    %v832 = vadd.f32 %v612, %v768
    %v833 = vadd.f32 %v613, %v769
    %v834 = vadd.f32 %v614, %v770
    %v835 = vadd.f32 %v615, %v771
    %v836 = vadd.f32 %v616, %v772
    %v837 = vadd.f32 %v617, %v773
    %v838 = vadd.f32 %v618, %v774
    %v839 = vadd.f32 %v619, %v775
    %v840 = vadd.f32 %v620, %v776
    %v841 = vadd.f32 %v621, %v777
    %v842 = vadd.f32 %v622, %v778
    %v843 = vadd.f32 %v623, %v779
    %v844 = vadd.f32 %v624, %v780
    %v845 = vadd.f32 %v625, %v781
    %v846 = vadd.f32 %v626, %v782
    %v847 = vadd.f32 %v627, %v783
    %v848 = vadd.f32 %v628, %v784
    %v849 = vadd.f32 %v629, %v785
    %v850 = vadd.f32 %v630, %v786
    %v851 = vadd.f32 %v631, %v787
    %v852 = vadd.f32 %v632, %v788
    %v853 = vadd.f32 %v633, %v789
    %v854 = vadd.f32 %v634, %v790
    %v855 = vadd.f32 %v635, %v791
    %856 = vset.pattern.permute.xlu0 2
    %857 = vperm.xlu0 %856, %v45
    %v858 = vpop.permute.xlu0 %857
    %860 = vset.pattern.permute.xlu0 2
    %861 = vperm.xlu0 %860, %v46
    %v862 = vpop.permute.xlu0 %861
    %864 = vset.pattern.permute.xlu0 2
    %865 = vperm.xlu0 %864, %v47
    %v866 = vpop.permute.xlu0 %865
    %868 = vset.pattern.permute.xlu0 2
    %869 = vperm.xlu0 %868, %v48
    %v870 = vpop.permute.xlu0 %869
    %v872 = vlaneseq
    %v873 = vshrl.u32 %v872, 7
    %v874 = vsub.s32 6, %v873
    %v875 = vrot.slane %v441, %v874
    %v876 = vlaneseq
    %v877 = vshrl.u32 %v876, 7
    %v878 = vsub.s32 6, %v877
    %v879 = vrot.slane %v443, %v878
    %v880 = vlaneseq
    %v881 = vshrl.u32 %v880, 7
    %v882 = vsub.s32 6, %v881
    %v883 = vrot.slane %v445, %v882
    %v884 = vlaneseq
    %v885 = vshrl.u32 %v884, 7
    %v886 = vsub.s32 6, %v885
    %v887 = vrot.slane %v447, %v886
    %v888 = vlaneseq
    %v889 = vshrl.u32 %v888, 7
    %v890 = vsub.s32 6, %v889
    %v891 = vrot.slane %v449, %v890
    %v892 = vlaneseq
    %v893 = vshrl.u32 %v892, 7
    %v894 = vsub.s32 6, %v893
    %v895 = vrot.slane %v451, %v894
    %v896 = vlaneseq
    %v897 = vshrl.u32 %v896, 7
    %v898 = vsub.s32 6, %v897
    %v899 = vrot.slane %v453, %v898
    %v900 = vlaneseq
    %v901 = vshrl.u32 %v900, 7
    %v902 = vsub.s32 6, %v901
    %v903 = vrot.slane %v455, %v902
    %v904 = vmul.f32 %v858, %v875
    %v905 = vmul.f32 %v862, %v875
    %v906 = vmul.f32 %v866, %v875
    %v907 = vmul.f32 %v870, %v875
    %v908 = vmul.f32 %v858, %v879
    %v909 = vmul.f32 %v862, %v879
    %v910 = vmul.f32 %v866, %v879
    %v911 = vmul.f32 %v870, %v879
    %v912 = vmul.f32 %v858, %v883
    %v913 = vmul.f32 %v862, %v883
    %v914 = vmul.f32 %v866, %v883
    %v915 = vmul.f32 %v870, %v883
    %v916 = vmul.f32 %v858, %v887
    %v917 = vmul.f32 %v862, %v887
    %v918 = vmul.f32 %v866, %v887
    %v919 = vmul.f32 %v870, %v887
    %v920 = vmul.f32 %v858, %v891
    %v921 = vmul.f32 %v862, %v891
    %v922 = vmul.f32 %v866, %v891
    %v923 = vmul.f32 %v870, %v891
    %v924 = vmul.f32 %v858, %v895
    %v925 = vmul.f32 %v862, %v895
    %v926 = vmul.f32 %v866, %v895
    %v927 = vmul.f32 %v870, %v895
    %v928 = vmul.f32 %v858, %v899
    %v929 = vmul.f32 %v862, %v899
    %v930 = vmul.f32 %v866, %v899
    %v931 = vmul.f32 %v870, %v899
    %v932 = vmul.f32 %v858, %v903
    %v933 = vmul.f32 %v862, %v903
    %v934 = vmul.f32 %v866, %v903
    %v935 = vmul.f32 %v870, %v903
    %936 = vset.pattern.permute.xlu0 2
    %937 = vperm.xlu0 %936, %v49
    %v938 = vpop.permute.xlu0 %937
    %940 = vset.pattern.permute.xlu0 2
    %941 = vperm.xlu0 %940, %v50
    %v942 = vpop.permute.xlu0 %941
    %944 = vset.pattern.permute.xlu0 2
    %945 = vperm.xlu0 %944, %v51
    %v946 = vpop.permute.xlu0 %945
    %v948 = vlaneseq
    %v949 = vshrl.u32 %v948, 7
    %v950 = vsub.s32 2, %v949
    %v951 = vrot.slane %v440, %v950
    %v952 = vlaneseq
    %v953 = vshrl.u32 %v952, 7
    %v954 = vsub.s32 2, %v953
    %v955 = vrot.slane %v442, %v954
    %v956 = vlaneseq
    %v957 = vshrl.u32 %v956, 7
    %v958 = vsub.s32 2, %v957
    %v959 = vrot.slane %v444, %v958
    %v960 = vlaneseq
    %v961 = vshrl.u32 %v960, 7
    %v962 = vsub.s32 2, %v961
    %v963 = vrot.slane %v446, %v962
    %v964 = vlaneseq
    %v965 = vshrl.u32 %v964, 7
    %v966 = vsub.s32 2, %v965
    %v967 = vrot.slane %v448, %v966
    %v968 = vlaneseq
    %v969 = vshrl.u32 %v968, 7
    %v970 = vsub.s32 2, %v969
    %v971 = vrot.slane %v450, %v970
    %v972 = vlaneseq
    %v973 = vshrl.u32 %v972, 7
    %v974 = vsub.s32 2, %v973
    %v975 = vrot.slane %v452, %v974
    %v976 = vlaneseq
    %v977 = vshrl.u32 %v976, 7
    %v978 = vsub.s32 2, %v977
    %v979 = vrot.slane %v454, %v978
    %v980 = vmul.f32 %v870, %v951
    %v981 = vmul.f32 %v938, %v951
    %v982 = vmul.f32 %v942, %v951
    %v983 = vmul.f32 %v946, %v951
    %v984 = vmul.f32 %v870, %v955
    %v985 = vmul.f32 %v938, %v955
    %v986 = vmul.f32 %v942, %v955
    %v987 = vmul.f32 %v946, %v955
    %v988 = vmul.f32 %v870, %v959
    %v989 = vmul.f32 %v938, %v959
    %v990 = vmul.f32 %v942, %v959
    %v991 = vmul.f32 %v946, %v959
    %v992 = vmul.f32 %v870, %v963
    %v993 = vmul.f32 %v938, %v963
    %v994 = vmul.f32 %v942, %v963
    %v995 = vmul.f32 %v946, %v963
    %v996 = vmul.f32 %v870, %v967
    %v997 = vmul.f32 %v938, %v967
    %v998 = vmul.f32 %v942, %v967
    %v999 = vmul.f32 %v946, %v967
    %v1000 = vmul.f32 %v870, %v971
    %v1001 = vmul.f32 %v938, %v971
    %v1002 = vmul.f32 %v942, %v971
    %v1003 = vmul.f32 %v946, %v971
    %v1004 = vmul.f32 %v870, %v975
    %v1005 = vmul.f32 %v938, %v975
    %v1006 = vmul.f32 %v942, %v975
    %v1007 = vmul.f32 %v946, %v975
    %v1008 = vmul.f32 %v870, %v979
    %v1009 = vmul.f32 %v938, %v979
    %v1010 = vmul.f32 %v942, %v979
    %v1011 = vmul.f32 %v946, %v979
    %v1012 = vadd.f32 %v792, %v904
    %v1013 = vadd.f32 %v793, %v905
    %v1014 = vadd.f32 %v794, %v906
    %v1015 = vadd.f32 %v795, %v907
    %v1016 = vadd.f32 %v796, %v908
    %v1017 = vadd.f32 %v797, %v909
    %v1018 = vadd.f32 %v798, %v910
    %v1019 = vadd.f32 %v799, %v911
    %v1020 = vadd.f32 %v800, %v912
    %v1021 = vadd.f32 %v801, %v913
    %v1022 = vadd.f32 %v802, %v914
    %v1023 = vadd.f32 %v803, %v915
    %v1024 = vadd.f32 %v804, %v916
    %v1025 = vadd.f32 %v805, %v917
    %v1026 = vadd.f32 %v806, %v918
    %v1027 = vadd.f32 %v807, %v919
    %v1028 = vadd.f32 %v808, %v920
    %v1029 = vadd.f32 %v809, %v921
    %v1030 = vadd.f32 %v810, %v922
    %v1031 = vadd.f32 %v811, %v923
    %v1032 = vadd.f32 %v812, %v924
    %v1033 = vadd.f32 %v813, %v925
    %v1034 = vadd.f32 %v814, %v926
    %v1035 = vadd.f32 %v815, %v927
    %v1036 = vadd.f32 %v816, %v928
    %v1037 = vadd.f32 %v817, %v929
    %v1038 = vadd.f32 %v818, %v930
    %v1039 = vadd.f32 %v819, %v931
    %v1040 = vadd.f32 %v820, %v932
    %v1041 = vadd.f32 %v821, %v933
    %v1042 = vadd.f32 %v822, %v934
    %v1043 = vadd.f32 %v823, %v935
    %v1044 = vadd.f32 %v824, %v980
    %v1045 = vadd.f32 %v825, %v981
    %v1046 = vadd.f32 %v826, %v982
    %v1047 = vadd.f32 %v827, %v983
    %v1048 = vadd.f32 %v828, %v984
    %v1049 = vadd.f32 %v829, %v985
    %v1050 = vadd.f32 %v830, %v986
    %v1051 = vadd.f32 %v831, %v987
    %v1052 = vadd.f32 %v832, %v988
    %v1053 = vadd.f32 %v833, %v989
    %v1054 = vadd.f32 %v834, %v990
    %v1055 = vadd.f32 %v835, %v991
    %v1056 = vadd.f32 %v836, %v992
    %v1057 = vadd.f32 %v837, %v993
    %v1058 = vadd.f32 %v838, %v994
    %v1059 = vadd.f32 %v839, %v995
    %v1060 = vadd.f32 %v840, %v996
    %v1061 = vadd.f32 %v841, %v997
    %v1062 = vadd.f32 %v842, %v998
    %v1063 = vadd.f32 %v843, %v999
    %v1064 = vadd.f32 %v844, %v1000
    %v1065 = vadd.f32 %v845, %v1001
    %v1066 = vadd.f32 %v846, %v1002
    %v1067 = vadd.f32 %v847, %v1003
    %v1068 = vadd.f32 %v848, %v1004
    %v1069 = vadd.f32 %v849, %v1005
    %v1070 = vadd.f32 %v850, %v1006
    %v1071 = vadd.f32 %v851, %v1007
    %v1072 = vadd.f32 %v852, %v1008
    %v1073 = vadd.f32 %v853, %v1009
    %v1074 = vadd.f32 %v854, %v1010
    %v1075 = vadd.f32 %v855, %v1011
    %1076 = vset.pattern.permute.xlu0 3
    %1077 = vperm.xlu0 %1076, %v45
    %v1078 = vpop.permute.xlu0 %1077
    %1080 = vset.pattern.permute.xlu0 3
    %1081 = vperm.xlu0 %1080, %v46
    %v1082 = vpop.permute.xlu0 %1081
    %1084 = vset.pattern.permute.xlu0 3
    %1085 = vperm.xlu0 %1084, %v47
    %v1086 = vpop.permute.xlu0 %1085
    %1088 = vset.pattern.permute.xlu0 3
    %1089 = vperm.xlu0 %1088, %v48
    %v1090 = vpop.permute.xlu0 %1089
    %v1092 = vlaneseq
    %v1093 = vshrl.u32 %v1092, 7
    %v1094 = vsub.s32 7, %v1093
    %v1095 = vrot.slane %v441, %v1094
    %v1096 = vlaneseq
    %v1097 = vshrl.u32 %v1096, 7
    %v1098 = vsub.s32 7, %v1097
    %v1099 = vrot.slane %v443, %v1098
    %v1100 = vlaneseq
    %v1101 = vshrl.u32 %v1100, 7
    %v1102 = vsub.s32 7, %v1101
    %v1103 = vrot.slane %v445, %v1102
    %v1104 = vlaneseq
    %v1105 = vshrl.u32 %v1104, 7
    %v1106 = vsub.s32 7, %v1105
    %v1107 = vrot.slane %v447, %v1106
    %v1108 = vlaneseq
    %v1109 = vshrl.u32 %v1108, 7
    %v1110 = vsub.s32 7, %v1109
    %v1111 = vrot.slane %v449, %v1110
    %v1112 = vlaneseq
    %v1113 = vshrl.u32 %v1112, 7
    %v1114 = vsub.s32 7, %v1113
    %v1115 = vrot.slane %v451, %v1114
    %v1116 = vlaneseq
    %v1117 = vshrl.u32 %v1116, 7
    %v1118 = vsub.s32 7, %v1117
    %v1119 = vrot.slane %v453, %v1118
    %v1120 = vlaneseq
    %v1121 = vshrl.u32 %v1120, 7
    %v1122 = vsub.s32 7, %v1121
    %v1123 = vrot.slane %v455, %v1122
    %v1124 = vmul.f32 %v1078, %v1095
    %v1125 = vmul.f32 %v1082, %v1095
    %v1126 = vmul.f32 %v1086, %v1095
    %v1127 = vmul.f32 %v1090, %v1095
    %v1128 = vmul.f32 %v1078, %v1099
    %v1129 = vmul.f32 %v1082, %v1099
    %v1130 = vmul.f32 %v1086, %v1099
    %v1131 = vmul.f32 %v1090, %v1099
    %v1132 = vmul.f32 %v1078, %v1103
    %v1133 = vmul.f32 %v1082, %v1103
    %v1134 = vmul.f32 %v1086, %v1103
    %v1135 = vmul.f32 %v1090, %v1103
    %v1136 = vmul.f32 %v1078, %v1107
    %v1137 = vmul.f32 %v1082, %v1107
    %v1138 = vmul.f32 %v1086, %v1107
    %v1139 = vmul.f32 %v1090, %v1107
    %v1140 = vmul.f32 %v1078, %v1111
    %v1141 = vmul.f32 %v1082, %v1111
    %v1142 = vmul.f32 %v1086, %v1111
    %v1143 = vmul.f32 %v1090, %v1111
    %v1144 = vmul.f32 %v1078, %v1115
    %v1145 = vmul.f32 %v1082, %v1115
    %v1146 = vmul.f32 %v1086, %v1115
    %v1147 = vmul.f32 %v1090, %v1115
    %v1148 = vmul.f32 %v1078, %v1119
    %v1149 = vmul.f32 %v1082, %v1119
    %v1150 = vmul.f32 %v1086, %v1119
    %v1151 = vmul.f32 %v1090, %v1119
    %v1152 = vmul.f32 %v1078, %v1123
    %v1153 = vmul.f32 %v1082, %v1123
    %v1154 = vmul.f32 %v1086, %v1123
    %v1155 = vmul.f32 %v1090, %v1123
    %1156 = vset.pattern.permute.xlu0 3
    %1157 = vperm.xlu0 %1156, %v49
    %v1158 = vpop.permute.xlu0 %1157
    %1160 = vset.pattern.permute.xlu0 3
    %1161 = vperm.xlu0 %1160, %v50
    %v1162 = vpop.permute.xlu0 %1161
    %1164 = vset.pattern.permute.xlu0 3
    %1165 = vperm.xlu0 %1164, %v51
    %v1166 = vpop.permute.xlu0 %1165
    %v1168 = vlaneseq
    %v1169 = vshrl.u32 %v1168, 7
    %v1170 = vsub.s32 3, %v1169
    %v1171 = vrot.slane %v440, %v1170
    %v1172 = vlaneseq
    %v1173 = vshrl.u32 %v1172, 7
    %v1174 = vsub.s32 3, %v1173
    %v1175 = vrot.slane %v442, %v1174
    %v1176 = vlaneseq
    %v1177 = vshrl.u32 %v1176, 7
    %v1178 = vsub.s32 3, %v1177
    %v1179 = vrot.slane %v444, %v1178
    %v1180 = vlaneseq
    %v1181 = vshrl.u32 %v1180, 7
    %v1182 = vsub.s32 3, %v1181
    %v1183 = vrot.slane %v446, %v1182
    %v1184 = vlaneseq
    %v1185 = vshrl.u32 %v1184, 7
    %v1186 = vsub.s32 3, %v1185
    %v1187 = vrot.slane %v448, %v1186
    %v1188 = vlaneseq
    %v1189 = vshrl.u32 %v1188, 7
    %v1190 = vsub.s32 3, %v1189
    %v1191 = vrot.slane %v450, %v1190
    %v1192 = vlaneseq
    %v1193 = vshrl.u32 %v1192, 7
    %v1194 = vsub.s32 3, %v1193
    %v1195 = vrot.slane %v452, %v1194
    %v1196 = vlaneseq
    %v1197 = vshrl.u32 %v1196, 7
    %v1198 = vsub.s32 3, %v1197
    %v1199 = vrot.slane %v454, %v1198
    %v1200 = vmul.f32 %v1090, %v1171
    %v1201 = vmul.f32 %v1158, %v1171
    %v1202 = vmul.f32 %v1162, %v1171
    %v1203 = vmul.f32 %v1166, %v1171
    %v1204 = vmul.f32 %v1090, %v1175
    %v1205 = vmul.f32 %v1158, %v1175
    %v1206 = vmul.f32 %v1162, %v1175
    %v1207 = vmul.f32 %v1166, %v1175
    %v1208 = vmul.f32 %v1090, %v1179
    %v1209 = vmul.f32 %v1158, %v1179
    %v1210 = vmul.f32 %v1162, %v1179
    %v1211 = vmul.f32 %v1166, %v1179
    %v1212 = vmul.f32 %v1090, %v1183
    %v1213 = vmul.f32 %v1158, %v1183
    %v1214 = vmul.f32 %v1162, %v1183
    %v1215 = vmul.f32 %v1166, %v1183
    %v1216 = vmul.f32 %v1090, %v1187
    %v1217 = vmul.f32 %v1158, %v1187
    %v1218 = vmul.f32 %v1162, %v1187
    %v1219 = vmul.f32 %v1166, %v1187
    %v1220 = vmul.f32 %v1090, %v1191
    %v1221 = vmul.f32 %v1158, %v1191
    %v1222 = vmul.f32 %v1162, %v1191
    %v1223 = vmul.f32 %v1166, %v1191
    %v1224 = vmul.f32 %v1090, %v1195
    %v1225 = vmul.f32 %v1158, %v1195
    %v1226 = vmul.f32 %v1162, %v1195
    %v1227 = vmul.f32 %v1166, %v1195
    %v1228 = vmul.f32 %v1090, %v1199
    %v1229 = vmul.f32 %v1158, %v1199
    %v1230 = vmul.f32 %v1162, %v1199
    %v1231 = vmul.f32 %v1166, %v1199
    %v1232 = vadd.f32 %v1012, %v1124
    %v1233 = vadd.f32 %v1013, %v1125
    %v1234 = vadd.f32 %v1014, %v1126
    %v1235 = vadd.f32 %v1015, %v1127
    %v1236 = vadd.f32 %v1016, %v1128
    %v1237 = vadd.f32 %v1017, %v1129
    %v1238 = vadd.f32 %v1018, %v1130
    %v1239 = vadd.f32 %v1019, %v1131
    %v1240 = vadd.f32 %v1020, %v1132
    %v1241 = vadd.f32 %v1021, %v1133
    %v1242 = vadd.f32 %v1022, %v1134
    %v1243 = vadd.f32 %v1023, %v1135
    %v1244 = vadd.f32 %v1024, %v1136
    %v1245 = vadd.f32 %v1025, %v1137
    %v1246 = vadd.f32 %v1026, %v1138
    %v1247 = vadd.f32 %v1027, %v1139
    %v1248 = vadd.f32 %v1028, %v1140
    %v1249 = vadd.f32 %v1029, %v1141
    %v1250 = vadd.f32 %v1030, %v1142
    %v1251 = vadd.f32 %v1031, %v1143
    %v1252 = vadd.f32 %v1032, %v1144
    %v1253 = vadd.f32 %v1033, %v1145
    %v1254 = vadd.f32 %v1034, %v1146
    %v1255 = vadd.f32 %v1035, %v1147
    %v1256 = vadd.f32 %v1036, %v1148
    %v1257 = vadd.f32 %v1037, %v1149
    %v1258 = vadd.f32 %v1038, %v1150
    %v1259 = vadd.f32 %v1039, %v1151
    %v1260 = vadd.f32 %v1040, %v1152
    %v1261 = vadd.f32 %v1041, %v1153
    %v1262 = vadd.f32 %v1042, %v1154
    %v1263 = vadd.f32 %v1043, %v1155
    %v1264 = vadd.f32 %v1044, %v1200
    %v1265 = vadd.f32 %v1045, %v1201
    %v1266 = vadd.f32 %v1046, %v1202
    %v1267 = vadd.f32 %v1047, %v1203
    %v1268 = vadd.f32 %v1048, %v1204
    %v1269 = vadd.f32 %v1049, %v1205
    %v1270 = vadd.f32 %v1050, %v1206
    %v1271 = vadd.f32 %v1051, %v1207
    %v1272 = vadd.f32 %v1052, %v1208
    %v1273 = vadd.f32 %v1053, %v1209
    %v1274 = vadd.f32 %v1054, %v1210
    %v1275 = vadd.f32 %v1055, %v1211
    %v1276 = vadd.f32 %v1056, %v1212
    %v1277 = vadd.f32 %v1057, %v1213
    %v1278 = vadd.f32 %v1058, %v1214
    %v1279 = vadd.f32 %v1059, %v1215
    %v1280 = vadd.f32 %v1060, %v1216
    %v1281 = vadd.f32 %v1061, %v1217
    %v1282 = vadd.f32 %v1062, %v1218
    %v1283 = vadd.f32 %v1063, %v1219
    %v1284 = vadd.f32 %v1064, %v1220
    %v1285 = vadd.f32 %v1065, %v1221
    %v1286 = vadd.f32 %v1066, %v1222
    %v1287 = vadd.f32 %v1067, %v1223
    %v1288 = vadd.f32 %v1068, %v1224
    %v1289 = vadd.f32 %v1069, %v1225
    %v1290 = vadd.f32 %v1070, %v1226
    %v1291 = vadd.f32 %v1071, %v1227
    %v1292 = vadd.f32 %v1072, %v1228
    %v1293 = vadd.f32 %v1073, %v1229
    %v1294 = vadd.f32 %v1074, %v1230
    %v1295 = vadd.f32 %v1075, %v1231
    %1296 = vst.msk [vmem:[%s3 + $0x10] sm:$0xff] %vm456, %v1232
    %1297 = vst.msk [vmem:[%s3 + $0x18] sm:$0xff] %vm456, %v1233
    %1298 = vst.msk [vmem:[%s3 + $0x20] sm:$0xff] %vm456, %v1234
    %vm1299 = vcmask 532480
    %1300 = vst.msk [vmem:[%s3 + $0x28] sm:$0x1] %vm1299, %v1235
    %1301 = vst.msk [vmem:[%s3 + $0x58] sm:$0xff] %vm456, %v1236
    %1302 = vst.msk [vmem:[%s3 + $0x60] sm:$0xff] %vm456, %v1237
    %1303 = vst.msk [vmem:[%s3 + $0x68] sm:$0xff] %vm456, %v1238
    %1304 = vst.msk [vmem:[%s3 + $0x70] sm:$0x1] %vm1299, %v1239
    %1305 = vst.msk [vmem:[%s3 + $0xa0] sm:$0xff] %vm456, %v1240
    %1306 = vst.msk [vmem:[%s3 + $0xa8] sm:$0xff] %vm456, %v1241
    %1307 = vst.msk [vmem:[%s3 + $0xb0] sm:$0xff] %vm456, %v1242
    %1308 = vst.msk [vmem:[%s3 + $0xb8] sm:$0x1] %vm1299, %v1243
    %1309 = vst.msk [vmem:[%s3 + $0xe8] sm:$0xff] %vm456, %v1244
    %1310 = vst.msk [vmem:[%s3 + $0xf0] sm:$0xff] %vm456, %v1245
    %1311 = vst.msk [vmem:[%s3 + $0xf8] sm:$0xff] %vm456, %v1246
    %1312 = vst.msk [vmem:[%s3 + $0x100] sm:$0x1] %vm1299, %v1247
    %1313 = vst.msk [vmem:[%s3 + $0x130] sm:$0xff] %vm456, %v1248
    %1314 = vst.msk [vmem:[%s3 + $0x138] sm:$0xff] %vm456, %v1249
    %1315 = vst.msk [vmem:[%s3 + $0x140] sm:$0xff] %vm456, %v1250
    %1316 = vst.msk [vmem:[%s3 + $0x148] sm:$0x1] %vm1299, %v1251
    %1317 = vst.msk [vmem:[%s3 + $0x178] sm:$0xff] %vm456, %v1252
    %1318 = vst.msk [vmem:[%s3 + $0x180] sm:$0xff] %vm456, %v1253
    %1319 = vst.msk [vmem:[%s3 + $0x188] sm:$0xff] %vm456, %v1254
    %1320 = vst.msk [vmem:[%s3 + $0x190] sm:$0x1] %vm1299, %v1255
    %1321 = vst.msk [vmem:[%s3 + $0x1c0] sm:$0xff] %vm456, %v1256
    %1322 = vst.msk [vmem:[%s3 + $0x1c8] sm:$0xff] %vm456, %v1257
    %1323 = vst.msk [vmem:[%s3 + $0x1d0] sm:$0xff] %vm456, %v1258
    %1324 = vst.msk [vmem:[%s3 + $0x1d8] sm:$0x1] %vm1299, %v1259
    %1325 = vst.msk [vmem:[%s3 + $0x208] sm:$0xff] %vm456, %v1260
    %1326 = vst.msk [vmem:[%s3 + $0x210] sm:$0xff] %vm456, %v1261
    %1327 = vst.msk [vmem:[%s3 + $0x218] sm:$0xff] %vm456, %v1262
    %1328 = vst.msk [vmem:[%s3 + $0x220] sm:$0x1] %vm1299, %v1263
    %vm1329 = vcmask 539649
    %1330 = vst.msk [vmem:[%s3 + $0x28] sm:$0xfe] %vm1329, %v1264
    %1331 = vst.msk [vmem:[%s3 + $0x30] sm:$0xff] %vm456, %v1265
    %1332 = vst.msk [vmem:[%s3 + $0x38] sm:$0xff] %vm456, %v1266
    %vm1333 = vcmask 533504
    %1334 = vst.msk [vmem:[%s3 + $0x40] sm:$0x3] %vm1333, %v1267
    %1335 = vst.msk [vmem:[%s3 + $0x70] sm:$0xfe] %vm1329, %v1268
    %1336 = vst.msk [vmem:[%s3 + $0x78] sm:$0xff] %vm456, %v1269
    %1337 = vst.msk [vmem:[%s3 + $0x80] sm:$0xff] %vm456, %v1270
    %1338 = vst.msk [vmem:[%s3 + $0x88] sm:$0x3] %vm1333, %v1271
    %1339 = vst.msk [vmem:[%s3 + $0xb8] sm:$0xfe] %vm1329, %v1272
    %1340 = vst.msk [vmem:[%s3 + $0xc0] sm:$0xff] %vm456, %v1273
    %1341 = vst.msk [vmem:[%s3 + $0xc8] sm:$0xff] %vm456, %v1274
    %1342 = vst.msk [vmem:[%s3 + $0xd0] sm:$0x3] %vm1333, %v1275
    %1343 = vst.msk [vmem:[%s3 + $0x100] sm:$0xfe] %vm1329, %v1276
    %1344 = vst.msk [vmem:[%s3 + $0x108] sm:$0xff] %vm456, %v1277
    %1345 = vst.msk [vmem:[%s3 + $0x110] sm:$0xff] %vm456, %v1278
    %1346 = vst.msk [vmem:[%s3 + $0x118] sm:$0x3] %vm1333, %v1279
    %1347 = vst.msk [vmem:[%s3 + $0x148] sm:$0xfe] %vm1329, %v1280
    %1348 = vst.msk [vmem:[%s3 + $0x150] sm:$0xff] %vm456, %v1281
    %1349 = vst.msk [vmem:[%s3 + $0x158] sm:$0xff] %vm456, %v1282
    %1350 = vst.msk [vmem:[%s3 + $0x160] sm:$0x3] %vm1333, %v1283
    %1351 = vst.msk [vmem:[%s3 + $0x190] sm:$0xfe] %vm1329, %v1284
    %1352 = vst.msk [vmem:[%s3 + $0x198] sm:$0xff] %vm456, %v1285
    %1353 = vst.msk [vmem:[%s3 + $0x1a0] sm:$0xff] %vm456, %v1286
    %1354 = vst.msk [vmem:[%s3 + $0x1a8] sm:$0x3] %vm1333, %v1287
    %1355 = vst.msk [vmem:[%s3 + $0x1d8] sm:$0xfe] %vm1329, %v1288
    %1356 = vst.msk [vmem:[%s3 + $0x1e0] sm:$0xff] %vm456, %v1289
    %1357 = vst.msk [vmem:[%s3 + $0x1e8] sm:$0xff] %vm456, %v1290
    %1358 = vst.msk [vmem:[%s3 + $0x1f0] sm:$0x3] %vm1333, %v1291
    %1359 = vst.msk [vmem:[%s3 + $0x220] sm:$0xfe] %vm1329, %v1292
    %1360 = vst.msk [vmem:[%s3 + $0x228] sm:$0xff] %vm456, %v1293
    %1361 = vst.msk [vmem:[%s3 + $0x230] sm:$0xff] %vm456, %v1294
    %1362 = vst.msk [vmem:[%s3 + $0x238] sm:$0x3] %vm1333, %v1295
    // Predicated region
    $region18: #{tpu_custom_call.1} parent=1 // pred_check
      _
    $region19: #{tpu_custom_call.1} parent=1 // pred_check_branch
      %1364 = sbr.rel (0) target = $region21
    $region20: #{tpu_custom_call.1} parent=1 // pred_region
      _
    $region21: #{tpu_custom_call.1} parent=1 // pred_fallthru
      _
    // Predicated region
    $region22: #{tpu_custom_call.1} parent=1 // pred_check
      _
    $region23: #{tpu_custom_call.1} parent=1 // pred_check_branch
      %1366 = sbr.rel (0) target = $region25
    $region24: #{tpu_custom_call.1} parent=1 // pred_region
      _
    $region25: #{tpu_custom_call.1} parent=1 // pred_fallthru
      _
    %1367 = vsyncpa [#allocation3], 1

</llo_original>
